<compile_context>
chip_gen: v6e
topology: v6e:2x2x1
jax: 0.10.0
libtpu: 0.0.40
codegen_flags: <defaults>
</compile_context>

<pallas_src>
import functools
import math

import jax
import jax.numpy as jnp
from jax.experimental import pallas as pl
from jax.experimental.pallas import tpu as pltpu

_LANES = 128
_MIN_SPLIT_BYTES = 1 << 20   # force a multi-step grid above this size
_TARGET_MIN_STEPS = 8        # enough steps to pipeline DMAs + feed 2 v7x TCs


def _relu_kernel(x_ref, o_ref):
    # Elementwise max(x, 0) on the current VMEM tile (VPU). Scalar 0 avoids a
    # broadcast temporary and preserves dtype.
    o_ref[...] = jnp.maximum(x_ref[...], 0)


def _cdiv(a: int, b: int) -> int:
    return -(-a // b)


def _round_up(a: int, m: int) -> int:
    return _cdiv(a, m) * m


def _round_down(a: int, m: int) -> int:
    return (a // m) * m


def _sublane_for_dtype(dtype) -> int:
    itemsize = jnp.dtype(dtype).itemsize
    return {4: 8, 2: 16, 1: 32}.get(itemsize, 8)


@functools.lru_cache(maxsize=None)
def _vmem_plan() -> tuple[int, int]:
    """(per-tile byte budget, scoped vmem_limit_bytes) for the current TPU gen."""
    cap = 64 << 20  # conservative fallback (v7x per-TC VMEM)
    try:
        info = pltpu.get_tpu_info()
        cap = int(getattr(info, "vmem_capacity_bytes", cap) or cap)
    except Exception:
        pass
    # Scoped limit: half the physical VMEM, capped at 64 MiB.
    vmem_limit = min(cap // 2, 64 << 20)
    # 4 live buffers (in + out, double buffered) kept at ~half the limit.
    tile_budget = max(vmem_limit // 8, 1 << 20)
    return tile_budget, vmem_limit


def _pick_tiles(rows: int, lanes: int, itemsize: int, sublane: int,
                tile_budget: int) -> tuple[int, int, tuple[int, int]]:
    """Pick (tile_rows, tile_lanes, grid) honoring the (8,128) block rules."""
    total_bytes = rows * lanes * itemsize

    # Lane tiling: keep the full lane extent if even a minimal-sublane tile
    # fits the budget; otherwise tile lanes in multiples of 128.
    if lanes * itemsize * sublane <= tile_budget:
        tile_lanes = lanes
    else:
        tile_lanes = max(_LANES,
                         _round_down(tile_budget // (sublane * itemsize), _LANES))
        tile_lanes = min(tile_lanes, _round_up(lanes, _LANES))
    grid_l = _cdiv(lanes, tile_lanes)

    # Row tiling: largest multiple of `sublane` within the tile budget.
    padded_lanes = _round_up(tile_lanes, _LANES)
    bytes_per_row = max(padded_lanes * itemsize, 1)
    tile_rows = max(sublane, _round_down(tile_budget // bytes_per_row, sublane))

    # Never emit a (near-)single-block grid for multi-MiB inputs: with one
    # step there is no read/compute/write overlap and one v7x core idles.
    if total_bytes > _MIN_SPLIT_BYTES:
        need_r = max(1, _cdiv(_TARGET_MIN_STEPS, grid_l))
        if _cdiv(rows, tile_rows) < need_r:
            tile_rows = max(sublane, _round_up(_cdiv(rows, need_r), sublane))

    # Clamp to the array extents (a block equal to the full dim is always
    # legal, even when not a multiple of 8 / 128).
    if tile_rows >= rows:
        tile_rows = rows
    if tile_lanes >= lanes:
        tile_lanes = lanes

    grid = (_cdiv(rows, tile_rows), _cdiv(lanes, tile_lanes))
    return tile_rows, tile_lanes, grid


def _relu_2d(x2d: jax.Array, *, donate: bool = False) -> jax.Array:
    rows, lanes = x2d.shape
    dtype = x2d.dtype
    itemsize = jnp.dtype(dtype).itemsize
    sublane = _sublane_for_dtype(dtype)
    tile_budget, vmem_limit = _vmem_plan()
    tile_rows, tile_lanes, grid = _pick_tiles(rows, lanes, itemsize, sublane,
                                              tile_budget)

    return pl.pallas_call(
        _relu_kernel,
        out_shape=jax.ShapeDtypeStruct((rows, lanes), dtype),
        grid_spec=pltpu.PrefetchScalarGridSpec(
            num_scalar_prefetch=0,
            grid=grid,
            in_specs=[pl.BlockSpec((tile_rows, tile_lanes), lambda i, j: (i, j))],
            out_specs=pl.BlockSpec((tile_rows, tile_lanes), lambda i, j: (i, j)),
        ),
        compiler_params=pltpu.CompilerParams(
            dimension_semantics=("parallel", "parallel"),
            vmem_limit_bytes=vmem_limit,
        ),
        input_output_aliases=({0: 0} if donate else {}),
    )(x2d)


def relu(x: jax.Array, *, inplace: bool = False) -> jax.Array:
    """ReLU(x) = max(0, x), matching F.relu semantics (same shape & dtype)."""
    orig_shape = x.shape
    n = x.size
    if n == 0:
        return x
    donate = bool(inplace)  # only avoids an output alloc when x is donated under jit

    # Path A: natural 2-D slab — any array with last dim >= 128. Lane blocks
    # are either the full last dim or 128-multiples of it: no copies, no pad.
    if x.ndim >= 2 and x.shape[-1] >= _LANES:
        last = x.shape[-1]
        rows = n // last
        out = _relu_2d(x.reshape(rows, last), donate=donate)
        return out.reshape(orig_shape)

    # Path B: flat, no padding — total size a multiple of 128.
    if n % _LANES == 0:
        out = _relu_2d(x.reshape(n // _LANES, _LANES), donate=donate)
        return out.reshape(orig_shape)

    # Path C: whole array smaller than one lane row — single tiny block.
    if n < _LANES:
        out = _relu_2d(x.reshape(1, n), donate=donate)
        return out.reshape(orig_shape)

    # Path D: ragged flat size — kernel on the 128-aligned prefix, plain
    # jnp.maximum on the <128-element remainder. Avoids the full-array
    # pad + slice round-trip of the previous version.
    flat = x.reshape(-1)
    n_main = (n // _LANES) * _LANES
    main = _relu_2d(flat[:n_main].reshape(n_main // _LANES, _LANES))
    tail = jnp.maximum(flat[n_main:], 0)
    return jnp.concatenate([main.reshape(-1), tail]).reshape(orig_shape)


class ReLU:
    """JAX/Pallas equivalent of torchact.nn.ReLU.

    inplace=True requests input/output buffer aliasing (input_output_aliases);
    it only removes the extra output allocation when the caller donates the
    input under jit — numerics are identical either way.
    """

    def __init__(self, inplace: bool = False):
        self.inplace = inplace

    def __call__(self, x):
        return relu(x, inplace=self.inplace)


if __name__ == "__main__":
    key = jax.random.PRNGKey(0)
    m = ReLU()

    # 1) Small NCHW-like tensor (total size divisible by 128 -> flat path B).
    x = jax.random.normal(key, (2, 4, 16, 16), dtype=jnp.float32)
    out = jax.block_until_ready(m(x))
    assert out.shape == x.shape and out.dtype == x.dtype
    assert jnp.allclose(out, jnp.maximum(x, 0.0)), "mismatch (f32 NCHW, path B)"

    # 2) Lane-dense 2-D path + bf16 (dtype-aware sublane rounding, path A).
    xb = jax.random.normal(key, (2, 8, 256), dtype=jnp.bfloat16)
    ob = jax.block_until_ready(m(xb))
    assert ob.shape == xb.shape and ob.dtype == xb.dtype
    assert jnp.allclose(ob.astype(jnp.float32),
                        jnp.maximum(xb, 0).astype(jnp.float32)), "mismatch (bf16, path A)"

    # 3) Docstring example (tiny <128-element path C).
    v = jnp.array([1.0, -2.0, 0.0, 3.0], dtype=jnp.float32)
    vo = jax.block_until_ready(m(v))
    assert jnp.allclose(vo, jnp.array([1.0, 0.0, 0.0, 3.0])), "example mismatch (path C)"

    # 4) Ragged flat size -> aligned prefix + tail, no full-array pad (path D).
    xr = jax.random.normal(key, (3, 127), dtype=jnp.float32)
    orr = jax.block_until_ready(m(xr))
    assert orr.shape == xr.shape
    assert jnp.allclose(orr, jnp.maximum(xr, 0.0)), "mismatch (ragged, path D)"

    # 5) Last dim >= 128 but not a multiple of 128 (full-dim lane block, path A).
    xw = jax.random.normal(key, (4, 200), dtype=jnp.float32)
    ow = jax.block_until_ready(m(xw))
    assert jnp.allclose(ow, jnp.maximum(xw, 0.0)), "mismatch (ragged lanes, path A)"

    # 6) >1 MiB input: exercises the forced multi-step (pipelined) grid.
    xg = jax.random.normal(key, (1024, 384), dtype=jnp.float32)
    og = jax.block_until_ready(m(xg))
    assert jnp.allclose(og, jnp.maximum(xg, 0.0)), "mismatch (multi-step grid)"

    print("KERNEL_OK")
</pallas_src>

<mosaic_0001>
module attributes {stable_mosaic.version = 11 : i64} {
  func.func @_relu_kernel(%arg0: i32, %arg1: i32, %arg2: memref<16x128xf32, #tpu.memory_space<vmem>>, %arg3: memref<16x128xf32, #tpu.memory_space<vmem>>) attributes {dimension_semantics = [#tpu.dimension_semantics<parallel>, #tpu.dimension_semantics<parallel>], iteration_bounds = array<i64: 1, 1>, scalar_prefetch = 0 : i64, scratch_operands = 0 : i64, tpu.core_type = #tpu.core_type<tc>, window_params = [{transform_indices = @transform_0, window_bounds = array<i64: 16, 128>}, {transform_indices = @transform_1, window_bounds = array<i64: 16, 128>}]} {
    %c0 = arith.constant 0 : index
    %c0_0 = arith.constant 0 : index
    %0 = vector.load %arg2[%c0, %c0_0] : memref<16x128xf32, #tpu.memory_space<vmem>>, vector<16x128xf32>
    %cst = arith.constant 0.000000e+00 : f32
    %1 = vector.broadcast %cst : f32 to vector<16x128xf32>
    %2 = arith.maximumf %0, %1 : vector<16x128xf32>
    %c0_1 = arith.constant 0 : index
    %c0_2 = arith.constant 0 : index
    %3 = vector.load %arg3[%c0_1, %c0_2] : memref<16x128xf32, #tpu.memory_space<vmem>>, vector<16x128xf32>
    tpu.vector_store %arg3[%c0_1, %c0_2], %2 {strides = array<i32>} : memref<16x128xf32, #tpu.memory_space<vmem>>, vector<16x128xf32>,
    return
  }
  func.func @transform_0(%arg0: i32, %arg1: i32) -> (i32, i32) {
    %c0_i32 = arith.constant 0 : i32
    return %arg0, %arg1 : i32, i32
  }
  func.func @transform_1(%arg0: i32, %arg1: i32) -> (i32, i32) {
    %c0_i32 = arith.constant 0 : i32
    return %arg0, %arg1 : i32, i32
  }
}

</mosaic_0001>

<llo_original>
// kernel: tpu_custom_call.1
$region0: #{tpu_custom_call.1}
  #allocation0 [shape = 'u32[]', space=smem, size = 0x4, offset = 0x4, fixed_abs, tag = 'smem constant byte address 0x4 - core index']
  #allocation1 [shape = 'u32[144,128]{1,0:T(1,128)}', space=vmem, size = 0x12000, scoped, tag = 'internal scratch']
  %s0 = inlined_call_operand.hbm [shape: f32[16,128], index: 0, kind: input, shape index: {}]
  %s1 = inlined_call_operand.hbm [shape: f32[16,128], index: 1, kind: output, shape index: {}]
  %s2 = sld [smem:[#allocation0]]
  $region18: #{tpu_custom_call.1} parent=0
    _
  %s4 = ssub.s32 1, %s2
  %s5 = scalar_select 0, %s4, %s2
  $region1: #{tpu_custom_call.1} parent=0
    #allocation2 [shape = 'u8[8192]{0}', space=vmem, size = 0x2000, scoped, tag = 'input window, operand 0, single buffered']
    #allocation3 [shape = 's32[1]{0}', space=sflag, size = 0x4, scoped, tag = 'scoped memory for tpu_custom_call.1']
    #allocation4 [shape = 's32[1]{0}', space=sflag, size = 0x4, scoped, tag = 'scoped memory for tpu_custom_call.1']
    #allocation5 [shape = 'u8[8192]{0}', space=vmem, size = 0x2000, scoped, tag = 'output window, operand 0, single buffered']
    %6 = vsyncpa [#allocation3], 0
    %7 = vsyncpa [#allocation4], 0
    // Predicated region
    $region2: #{tpu_custom_call.1} parent=1 // pred_check
      _
    $region3: #{tpu_custom_call.1} parent=1 // pred_check_branch
      %9 = sbr.rel (0) target = $region5
    $region4: #{tpu_custom_call.1} parent=1 // pred_region
      %s11 = ssub.s32 256, 256
      %12 = vsyncadd [#allocation3], %s11
      %s13 = sshll.u32 [#allocation2], 4
      %s14 = int_to_ptr.vmem [resolvable:$true] %s13
      %19 = dma.hbm_to_vmem [thread:$0]  %s0, 256, %s14, [#allocation3], 128, 128, 8
    $region5: #{tpu_custom_call.1} parent=1 // pred_fallthru
      _
    // Predicated region
    $region6: #{tpu_custom_call.1} parent=1 // pred_check
      _
    $region7: #{tpu_custom_call.1} parent=1 // pred_check_branch
      %21 = sbr.rel (0) target = $region9
    $region8: #{tpu_custom_call.1} parent=1 // pred_region
      %22 = dma.done [#allocation3], 256
    $region9: #{tpu_custom_call.1} parent=1 // pred_fallthru
      _
    %v23 = vld [vmem:[#allocation2] sm:$0xff]
    %v24 = vld [vmem:[#allocation2 + $0x8] sm:$0xff]
    %v25 = vmax.f32 %v23, 0.0
    %v26 = vmax.f32 %v24, 0.0
    %27 = vst [vmem:[#allocation5] sm:$0xff] %v25
    %28 = vst [vmem:[#allocation5 + $0x8] sm:$0xff] %v26
    // Predicated region
    $region10: #{tpu_custom_call.1} parent=1 // pred_check
      _
    $region11: #{tpu_custom_call.1} parent=1 // pred_check_branch
      %30 = sbr.rel (0) target = $region13
    $region12: #{tpu_custom_call.1} parent=1 // pred_region
      %s32 = ssub.s32 256, 256
      %33 = vsyncadd [#allocation4], %s32
      %s34 = sshll.u32 [#allocation5], 4
      %s35 = int_to_ptr.vmem [resolvable:$true] %s34
      %40 = dma.vmem_to_hbm [thread:$0]  %s35, 256, %s1, [#allocation4], 128, 128, 8
    $region13: #{tpu_custom_call.1} parent=1 // pred_fallthru
      _
    // Predicated region
    $region14: #{tpu_custom_call.1} parent=1 // pred_check
      _
    $region15: #{tpu_custom_call.1} parent=1 // pred_check_branch
      %42 = sbr.rel (0) target = $region17
    $region16: #{tpu_custom_call.1} parent=1 // pred_region
      %43 = dma.done [#allocation4], 256
    $region17: #{tpu_custom_call.1} parent=1 // pred_fallthru
      _
    %44 = vsyncpa [#allocation3], 1
    %45 = vsyncpa [#allocation4], 1

</llo_original>
